<compile_context>
chip_gen: v7x
topology: tpu7x:2x2x1
jax: 0.10.0
libtpu: 0.0.40
codegen_flags: <defaults>
</compile_context>

<pallas_src>
import jax
import jax.numpy as jnp
from jax.experimental import pallas as pl
from jax.experimental.pallas import tpu as pltpu


def tied_ae_kernel(x_ref, w_ref, enc_ref, rec_ref):
    x = x_ref[...]            # (block_b, inp)
    w = w_ref[...]            # (out, inp) -- resident across batch tiles

    # encoded = x @ W.T  : contract inp (last dim of both); no transpose needed.
    enc = jax.lax.dot_general(
        x, w,
        dimension_numbers=(((1,), (1,)), ((), ())),
        preferred_element_type=jnp.float32,
    )                         # (block_b, out), f32 accumulation

    # reconstructed = enc @ W : contract out (last of enc, first of W).
    # Cast enc to the operand dtype (no-op for f32; enables bf16 MXU feed if
    # the caller supplies bf16 inputs).
    rec = jax.lax.dot_general(
        enc.astype(w.dtype), w,
        dimension_numbers=(((1,), (0,)), ((), ())),
        preferred_element_type=jnp.float32,
    )                         # (block_b, inp), f32 accumulation

    enc_ref[...] = enc.astype(enc_ref.dtype)
    rec_ref[...] = rec.astype(rec_ref.dtype)


def _round_up(x, m):
    return (x + m - 1) // m * m


def tied_autoencoder(x, w, *, block_b=None):
    """x: (B, inp), w: (out, inp) -> (encoded (B, out), reconstructed (B, inp))."""
    B, inp = x.shape
    out, inp_w = w.shape
    assert inp == inp_w, "W last dim must match input feature dim"

    # Batch tile: multiple of 8 (sublane), as large as reasonable (<=512 rows).
    if block_b is None:
        block_b = min(512, _round_up(B, 8))
    block_b = max(8, _round_up(block_b, 8))

    # Pad batch so it divides evenly into tiles; slice the pad off afterwards.
    Bp = _round_up(B, block_b)
    if Bp != B:
        x = jnp.pad(x, ((0, Bp - B), (0, 0)))

    grid = (Bp // block_b,)
    itemsize = jnp.dtype(x.dtype).itemsize
    cost = pl.CostEstimate(
        flops=4 * B * out * inp,                     # two (B,inp)x(inp,out) matmuls
        transcendentals=0,
        bytes_accessed=itemsize * (B * inp          # x in
                                   + out * inp      # W in (read once)
                                   + B * out        # enc out
                                   + B * inp),      # rec out
    )

    enc, rec = pl.pallas_call(
        tied_ae_kernel,
        out_shape=(
            jax.ShapeDtypeStruct((Bp, out), x.dtype),   # encoded_feats
            jax.ShapeDtypeStruct((Bp, inp), x.dtype),   # reconstructed_output
        ),
        grid=grid,
        in_specs=[
            pl.BlockSpec((block_b, inp), lambda i: (i, 0)),   # x: tiled over batch
            pl.BlockSpec((out, inp), lambda i: (0, 0)),       # W: resident
        ],
        out_specs=(
            pl.BlockSpec((block_b, out), lambda i: (i, 0)),   # enc
            pl.BlockSpec((block_b, inp), lambda i: (i, 0)),   # rec
        ),
        compiler_params=pltpu.CompilerParams(
            dimension_semantics=("parallel",),
        ),
        cost_estimate=cost,
    )(x, w)

    if Bp != B:
        enc = enc[:B]
        rec = rec[:B]
    return enc, rec
    # TODO(synk): for production latents where W (out*inp*4B) exceeds ~20-30 MiB
    # (v7x 64 MiB VMEM), add an `out`-dimension reduction grid axis with an f32
    # VMEM accumulator (pl.when init/finalize) instead of a fully resident W.


if __name__ == "__main__":
    # Small shapes consistent with the module: inp=256 features, out=128 latent.
    # B=256 with block_b=128 exercises the multi-tile pipelined path.
    B, INP, OUT = 256, 256, 128

    key = jax.random.PRNGKey(0)
    kx, kw = jax.random.split(key)
    x = jax.random.normal(kx, (B, INP), dtype=jnp.float32)
    w = jax.random.normal(kw, (OUT, INP), dtype=jnp.float32)  # torch.randn(out, inp) analogue

    enc, rec = tied_autoencoder(x, w, block_b=128)
    jax.block_until_ready((enc, rec))

    # Cross-check against plain-JAX reference.
    enc_ref = x @ w.T
    rec_ref = enc_ref @ w
    assert enc.shape == (B, OUT) and rec.shape == (B, INP)
    assert jnp.allclose(enc, enc_ref, atol=1e-3, rtol=1e-3)
    assert jnp.allclose(rec, rec_ref, atol=1e-2, rtol=1e-3)

    # Ragged batch (exercises the padding path): B=50 -> padded to one 56-row tile.
    x2 = jax.random.normal(kx, (50, INP), dtype=jnp.float32)
    enc2, rec2 = tied_autoencoder(x2, w)
    jax.block_until_ready((enc2, rec2))
    assert enc2.shape == (50, OUT) and rec2.shape == (50, INP)
    assert jnp.allclose(enc2, x2 @ w.T, atol=1e-3, rtol=1e-3)
    assert jnp.allclose(rec2, (x2 @ w.T) @ w, atol=1e-2, rtol=1e-3)

    print("KERNEL_OK")
</pallas_src>

<mosaic_0001>
module attributes {stable_mosaic.version = 11 : i64} {
  func.func @tied_ae_kernel(%arg0: i32, %arg1: memref<128x256xf32, #tpu.memory_space<vmem>>, %arg2: memref<128x256xf32, #tpu.memory_space<vmem>>, %arg3: memref<128x128xf32, #tpu.memory_space<vmem>>, %arg4: memref<128x256xf32, #tpu.memory_space<vmem>>) attributes {dimension_semantics = [#tpu.dimension_semantics<parallel>], iteration_bounds = array<i64: 2>, scalar_prefetch = 0 : i64, scratch_operands = 0 : i64, tpu.core_type = #tpu.core_type<tc>, window_params = [{transform_indices = @transform_0, window_bounds = array<i64: 128, 256>}, {pipeline_mode = #tpu.pipeline_mode<synchronous>, transform_indices = @transform_1, window_bounds = array<i64: 128, 256>}, {transform_indices = @transform_2, window_bounds = array<i64: 128, 128>}, {transform_indices = @transform_3, window_bounds = array<i64: 128, 256>}]} {
    %c0 = arith.constant 0 : index
    %c0_0 = arith.constant 0 : index
    %0 = vector.load %arg1[%c0, %c0_0] : memref<128x256xf32, #tpu.memory_space<vmem>>, vector<128x256xf32>
    %c0_1 = arith.constant 0 : index
    %c0_2 = arith.constant 0 : index
    %1 = vector.load %arg2[%c0_1, %c0_2] : memref<128x256xf32, #tpu.memory_space<vmem>>, vector<128x256xf32>
    %cst = arith.constant dense<0.000000e+00> : vector<128x128xf32>
    %2 = tpu.matmul %0, %1, %cst {dimension_numbers = #tpu.dot_dimension_numbers<[1], [1], [0], [0], [0, 0, 1, 0], [], []>} : vector<128x256xf32>, vector<128x256xf32>, vector<128x128xf32> -> vector<128x128xf32>
    %cst_3 = arith.constant dense<0.000000e+00> : vector<128x256xf32>
    %3 = tpu.matmul %2, %1, %cst_3 {dimension_numbers = #tpu.dot_dimension_numbers<[1], [0], [0], [1], [0, 0, 1, 1], [], []>} : vector<128x128xf32>, vector<128x256xf32>, vector<128x256xf32> -> vector<128x256xf32>
    %c0_4 = arith.constant 0 : index
    %c0_5 = arith.constant 0 : index
    %4 = vector.load %arg3[%c0_4, %c0_5] : memref<128x128xf32, #tpu.memory_space<vmem>>, vector<128x128xf32>
    tpu.vector_store %arg3[%c0_4, %c0_5], %2 {strides = array<i32>} : memref<128x128xf32, #tpu.memory_space<vmem>>, vector<128x128xf32>,
    %c0_6 = arith.constant 0 : index
    %c0_7 = arith.constant 0 : index
    %5 = vector.load %arg4[%c0_6, %c0_7] : memref<128x256xf32, #tpu.memory_space<vmem>>, vector<128x256xf32>
    tpu.vector_store %arg4[%c0_6, %c0_7], %3 {strides = array<i32>} : memref<128x256xf32, #tpu.memory_space<vmem>>, vector<128x256xf32>,
    return
  }
  func.func @transform_0(%arg0: i32) -> (i32, i32) {
    %c0_i32 = arith.constant 0 : i32
    %c0_i32_0 = arith.constant 0 : i32
    return %arg0, %c0_i32 : i32, i32
  }
  func.func @transform_1(%arg0: i32) -> (i32, i32) {
    %c0_i32 = arith.constant 0 : i32
    %c0_i32_0 = arith.constant 0 : i32
    %c0_i32_1 = arith.constant 0 : i32
    return %c0_i32, %c0_i32_0 : i32, i32
  }
  func.func @transform_2(%arg0: i32) -> (i32, i32) {
    %c0_i32 = arith.constant 0 : i32
    %c0_i32_0 = arith.constant 0 : i32
    return %arg0, %c0_i32 : i32, i32
  }
  func.func @transform_3(%arg0: i32) -> (i32, i32) {
    %c0_i32 = arith.constant 0 : i32
    %c0_i32_0 = arith.constant 0 : i32
    return %arg0, %c0_i32 : i32, i32
  }
}

</mosaic_0001>

<llo_original>
// kernel: tpu_custom_call.1
$region0: #{tpu_custom_call.1}
  #allocation0 [shape = 'u32[]', space=smem, size = 0x4, offset = 0x4, fixed_abs, tag = 'smem constant byte address 0x4 - core index']
  #allocation1 [shape = 'u32[144,128]{1,0:T(1,128)}', space=vmem, size = 0x12000, scoped, tag = 'internal scratch']
  %s0 = inlined_call_operand.hbm [shape: f32[256,256], index: 0, kind: input, shape index: {}]
  %s1 = inlined_call_operand.hbm [shape: f32[128,256], index: 1, kind: input, shape index: {}]
  %s2 = inlined_call_operand.hbm [shape: f32[256,128], index: 2, kind: output, shape index: {0}]
  %s3 = inlined_call_operand.hbm [shape: f32[256,256], index: 3, kind: output, shape index: {1}]
  %4 = xla_tuple %s2, %s3
  %s5 = sld [smem:[#allocation0]]
  $region57: #{tpu_custom_call.1} parent=0
    _
  %s7 = ssub.s32 1, %s5
  %s8 = scalar_select 0, %s7, %s5
  $region1: #{tpu_custom_call.1} parent=0
    #allocation2 [shape = 'u8[262144]{0}', space=vmem, size = 0x40000, scoped, tag = 'input window, operand 0']
    #allocation3 [shape = 's32[2]{0}', space=sflag, size = 0x8, scoped, tag = 'scoped memory for tpu_custom_call.1']
    #allocation4 [shape = 's32[2]{0}', space=sflag, size = 0x8, scoped, tag = 'scoped memory for tpu_custom_call.1']
    #allocation5 [shape = 'u8[131072]{0}', space=vmem, size = 0x20000, scoped, tag = 'input window, operand 1, single buffered']
    #allocation6 [shape = 's32[1]{0}', space=sflag, size = 0x4, scoped, tag = 'scoped memory for tpu_custom_call.1']
    #allocation7 [shape = 'u8[131072]{0}', space=vmem, size = 0x20000, scoped, tag = 'output window, operand 0']
    #allocation8 [shape = 'u8[262144]{0}', space=vmem, size = 0x40000, scoped, tag = 'output window, operand 1']
    #allocation9 [shape = 's32[2]{0}', space=sflag, size = 0x8, scoped, tag = 'scoped memory for tpu_custom_call.1']
    %9 = vsyncpa [#allocation3], 0
    %s10 = scalar_lea.sflag [#allocation3], 1
    %11 = vsyncpa %s10, 0
    %12 = vsyncpa [#allocation6], 0
    %13 = vsyncpa [#allocation4], 0
    %s14 = scalar_lea.sflag [#allocation4], 1
    %15 = vsyncpa %s14, 0
    %16 = vsyncpa [#allocation9], 0
    %s17 = scalar_lea.sflag [#allocation9], 1
    %18 = vsyncpa %s17, 0
    loop: start=0, step=1, limit=4
    $region2: #{tpu_custom_call.1} parent=1 // loop_pre_header
      _
    $region3: #{tpu_custom_call.1} parent=1 // loop_header
      %s20 = sphi 0, %s24
      %p21 = scmp.ge.s32.totalorder %s20, 4
      %s30 = sphi 0, %s32
      %s33 = sphi 0, %s30
      %s34 = sphi 0, %s33
      %s50 = sphi 0, %s34
      %s54 = sphi 0, %s54
      %s56 = sphi 0, %s54
      %s57 = sphi 0, %s56
      %s71 = sphi 0, %s57
      %s77 = sphi 0, %s79
      %s80 = sphi 0, %s77
      %s81 = sphi 0, %s80
      %s97 = sphi 0, %s81
      %s103 = sphi 0, %s105
      %s106 = sphi 0, %s103
      %s107 = sphi 0, %s106
      %s123 = sphi 0, %s107
    $region4: #{tpu_custom_call.1} parent=1 // loop_header_branch
      %23 = sbr.rel (%p21) target = $region8
    $region5: #{tpu_custom_call.1} parent=1 // loop_body
      %s25 = ssub.s32 %s20, 1
      %s26 = ssub.s32 %s20, 2
      %s27 = sadd.s32 %s20, 1
      %s28 = ssub.s32 %s20, %s27
      %p29 = scmp.eq.s32.totalorder %s28, 0
      %s31 = sadd.s32 %s30, 1
      %s32 = scalar_select %p29, %s30, %s31
      %p35 = pneg %p29
      %p36 = scmp.eq.s32.totalorder %s20, 1
      %p37 = por %p35, %p36
      %p38 = scmp.ne.s32.totalorder %s30, %s33
      %p39 = scmp.eq.s32.totalorder %s20, 0
      %p40 = por %p38, %p39
      %p41 = scmp.ne.s32.totalorder %s30, %s33
      %p42 = scmp.eq.s32.totalorder %s25, 1
      %p43 = por %p41, %p42
      %p44 = scmp.ne.s32.totalorder %s33, %s34
      %p45 = scmp.eq.s32.totalorder %s25, 0
      %p46 = por %p44, %p45
      %p47 = scmp.ne.s32.totalorder %s33, %s34
      %p48 = scmp.eq.s32.totalorder %s26, 1
      %p49 = por %p47, %p48
      %p51 = scmp.ne.s32.totalorder %s34, %s50
      %p52 = scmp.eq.s32.totalorder %s26, 0
      %p53 = por %p51, %p52
      %s55 = sadd.s32 %s54, 1
      %p58 = scmp.eq.s32.totalorder %s20, 1
      %p59 = scmp.ne.s32.totalorder %s54, %s56
      %p60 = scmp.eq.s32.totalorder %s20, 0
      %p61 = por %p59, %p60
      %p62 = scmp.ne.s32.totalorder %s54, %s56
      %p63 = scmp.eq.s32.totalorder %s25, 1
      %p64 = por %p62, %p63
      %p65 = scmp.ne.s32.totalorder %s56, %s57
      %p66 = scmp.eq.s32.totalorder %s25, 0
      %p67 = por %p65, %p66
      %p68 = scmp.ne.s32.totalorder %s56, %s57
      %p69 = scmp.eq.s32.totalorder %s26, 1
      %p70 = por %p68, %p69
      %p72 = scmp.ne.s32.totalorder %s57, %s71
      %p73 = scmp.eq.s32.totalorder %s26, 0
      %p74 = por %p72, %p73
      %s75 = ssub.s32 %s20, %s27
      %p76 = scmp.eq.s32.totalorder %s75, 0
      %s78 = sadd.s32 %s77, 1
      %s79 = scalar_select %p76, %s77, %s78
      %p82 = pneg %p76
      %p83 = scmp.eq.s32.totalorder %s20, 1
      %p84 = por %p82, %p83
      %p85 = scmp.ne.s32.totalorder %s77, %s80
      %p86 = scmp.eq.s32.totalorder %s20, 0
      %p87 = por %p85, %p86
      %p88 = scmp.ne.s32.totalorder %s77, %s80
      %p89 = scmp.eq.s32.totalorder %s25, 1
      %p90 = por %p88, %p89
      %p91 = scmp.ne.s32.totalorder %s80, %s81
      %p92 = scmp.eq.s32.totalorder %s25, 0
      %p93 = por %p91, %p92
      %p94 = scmp.ne.s32.totalorder %s80, %s81
      %p95 = scmp.eq.s32.totalorder %s26, 1
      %p96 = por %p94, %p95
      %p98 = scmp.ne.s32.totalorder %s81, %s97
      %p99 = scmp.eq.s32.totalorder %s26, 0
      %p100 = por %p98, %p99
      %s101 = ssub.s32 %s20, %s27
      %p102 = scmp.eq.s32.totalorder %s101, 0
      %s104 = sadd.s32 %s103, 1
      %s105 = scalar_select %p102, %s103, %s104
      %p108 = pneg %p102
      %p109 = scmp.eq.s32.totalorder %s20, 1
      %p110 = por %p108, %p109
      %p111 = scmp.ne.s32.totalorder %s103, %s106
      %p112 = scmp.eq.s32.totalorder %s20, 0
      %p113 = por %p111, %p112
      %p114 = scmp.ne.s32.totalorder %s103, %s106
      %p115 = scmp.eq.s32.totalorder %s25, 1
      %p116 = por %p114, %p115
      %p117 = scmp.ne.s32.totalorder %s106, %s107
      %p118 = scmp.eq.s32.totalorder %s25, 0
      %p119 = por %p117, %p118
      %p120 = scmp.ne.s32.totalorder %s106, %s107
      %p121 = scmp.eq.s32.totalorder %s26, 1
      %p122 = por %p120, %p121
      %p124 = scmp.ne.s32.totalorder %s107, %s123
      %p125 = scmp.eq.s32.totalorder %s26, 0
      %p126 = por %p124, %p125
      %p127 = scmp.le.s32.totalorder 1, %s20
      %p128 = scmp.lt.s32.totalorder %s20, 3
      %p129 = pnand %p127, %p128
      %p130 = pneg %p129
      // Predicated region
      $region9: #{tpu_custom_call.1} parent=5 // pred_check
        _
      $region10: #{tpu_custom_call.1} parent=5 // pred_check_branch
        %132 = sbr.rel (%p129) target = $region12
      $region11: #{tpu_custom_call.1} parent=5 // pred_region
        %s133 = ssub.s32 %s20, 1
        // Predicated region
        $region13: #{tpu_custom_call.1} parent=11 // pred_check
          %p134 = pneg %p67
        $region14: #{tpu_custom_call.1} parent=11 // pred_check_branch
          %136 = sbr.rel (%p134) target = $region16
        $region15: #{tpu_custom_call.1} parent=11 // pred_region
          %s138 = ssub.s32 4096, 4096
          %139 = vsyncadd [#allocation6], %s138
          %s140 = sshll.u32 [#allocation5], 4
          %s141 = int_to_ptr.vmem [resolvable:$true] %s140
          %146 = dma.hbm_to_vmem [thread:$0]  %s1, 4096, %s141, [#allocation6], 256, 256, 16
        $region16: #{tpu_custom_call.1} parent=11 // pred_fallthru
          _
      $region12: #{tpu_custom_call.1} parent=5 // pred_fallthru
        _
      %p147 = scmp.lt.s32.totalorder %s20, 2
      // Predicated region
      $region17: #{tpu_custom_call.1} parent=5 // pred_check
        %p148 = pneg %p147
      $region18: #{tpu_custom_call.1} parent=5 // pred_check_branch
        %150 = sbr.rel (%p148) target = $region20
      $region19: #{tpu_custom_call.1} parent=5 // pred_region
        // Predicated region
        $region21: #{tpu_custom_call.1} parent=19 // pred_check
          %p151 = pneg %p40
        $region22: #{tpu_custom_call.1} parent=19 // pred_check_branch
          %153 = sbr.rel (%p151) target = $region24
        $region23: #{tpu_custom_call.1} parent=19 // pred_region
          %s154 = sand.u32 %s30, 1
          %s155 = scalar_lea.sflag [#allocation3], %s154
          %s156 = sand.u32 %s30, 1
          %s157 = smul.addr %s156, 256
          %s158 = scalar_lea.vmem [#allocation2], %s157
          %s159 = smul.u32 16, %s20
          %s161 = ssub.s32 4096, 4096
          %162 = vsyncadd %s155, %s161
          %s163 = smul.addr %s159, 2
          %s164 = smul.addr %s163, 128
          %s165 = scalar_lea.hbm %s0, %s164
          %s166 = sshll.u32 %s158, 4
          %s167 = int_to_ptr.vmem [resolvable:$true] %s166
          %172 = dma.hbm_to_vmem [thread:$0]  %s165, 4096, %s167, %s155, 256, 256, 16
        $region24: #{tpu_custom_call.1} parent=19 // pred_fallthru
          _
      $region20: #{tpu_custom_call.1} parent=5 // pred_fallthru
        _
      %p173 = scmp.le.s32.totalorder 1, %s20
      %p174 = scmp.lt.s32.totalorder %s20, 3
      %p175 = pnand %p173, %p174
      %p176 = pneg %p175
      // Predicated region
      $region25: #{tpu_custom_call.1} parent=5 // pred_check
        _
      $region26: #{tpu_custom_call.1} parent=5 // pred_check_branch
        %178 = sbr.rel (%p175) target = $region28
      $region27: #{tpu_custom_call.1} parent=5 // pred_region
        %s179 = ssub.s32 %s20, 1
        %s180 = sand.u32 %s33, 1
        %s181 = scalar_lea.sflag [#allocation3], %s180
        %s182 = sand.u32 %s33, 1
        %s183 = smul.addr %s182, 256
        %s184 = scalar_lea.vmem [#allocation2], %s183
        // Predicated region
        $region29: #{tpu_custom_call.1} parent=27 // pred_check
          %p185 = pneg %p46
        $region30: #{tpu_custom_call.1} parent=27 // pred_check_branch
          %187 = sbr.rel (%p185) target = $region32
        $region31: #{tpu_custom_call.1} parent=27 // pred_region
          %188 = dma.done %s181, 4096
        $region32: #{tpu_custom_call.1} parent=27 // pred_fallthru
          _
        // Predicated region
        $region33: #{tpu_custom_call.1} parent=27 // pred_check
          %p189 = pneg %p67
        $region34: #{tpu_custom_call.1} parent=27 // pred_check_branch
          %191 = sbr.rel (%p189) target = $region36
        $region35: #{tpu_custom_call.1} parent=27 // pred_region
          %192 = dma.done [#allocation6], 4096
        $region36: #{tpu_custom_call.1} parent=27 // pred_fallthru
          _
        %s193 = sand.u32 %s33, 1
        %s194 = scalar_lea.sflag [#allocation3], %s193
        %s195 = sand.u32 %s33, 1
        %s196 = smul.addr %s195, 256
        %s197 = scalar_lea.vmem [#allocation2], %s196
        %p198 = pneg %p46
        %p199 = pneg %p43
        %p200 = pneg %p67
        %p201 = pneg %p64
        %p202 = pneg %p93
        %p203 = pneg %p90
        %s204 = sand.u32 %s80, 1
        %s205 = scalar_lea.sflag [#allocation4], %s204
        %s206 = sand.u32 %s80, 1
        %s207 = smul.addr %s206, 128
        %s208 = scalar_lea.vmem [#allocation7], %s207
        %p209 = pneg %p119
        %p210 = pneg %p116
        %s211 = sand.u32 %s106, 1
        %s212 = scalar_lea.sflag [#allocation9], %s211
        %s213 = sand.u32 %s106, 1
        %s214 = smul.addr %s213, 256
        %s215 = scalar_lea.vmem [#allocation8], %s214
        %s216 = smul.u32 16, %s25
        %s217 = smul.u32 16, %s25
        %s218 = smul.u32 16, %s25
        %v219 = vld [vmem:[%s184] sm:$0xff]
        %v220 = vld [vmem:[%s184 + $0x8] sm:$0xff]
        %v221 = vld [vmem:[%s184 + $0x10] sm:$0xff]
        %v222 = vld [vmem:[%s184 + $0x18] sm:$0xff]
        %v223 = vld [vmem:[%s184 + $0x20] sm:$0xff]
        %v224 = vld [vmem:[%s184 + $0x28] sm:$0xff]
        %v225 = vld [vmem:[%s184 + $0x30] sm:$0xff]
        %v226 = vld [vmem:[%s184 + $0x38] sm:$0xff]
        %v227 = vld [vmem:[%s184 + $0x40] sm:$0xff]
        %v228 = vld [vmem:[%s184 + $0x48] sm:$0xff]
        %v229 = vld [vmem:[%s184 + $0x50] sm:$0xff]
        %v230 = vld [vmem:[%s184 + $0x58] sm:$0xff]
        %v231 = vld [vmem:[%s184 + $0x60] sm:$0xff]
        %v232 = vld [vmem:[%s184 + $0x68] sm:$0xff]
        %v233 = vld [vmem:[%s184 + $0x70] sm:$0xff]
        %v234 = vld [vmem:[%s184 + $0x78] sm:$0xff]
        %v235 = vld [vmem:[%s184 + $0x80] sm:$0xff]
        %v236 = vld [vmem:[%s184 + $0x88] sm:$0xff]
        %v237 = vld [vmem:[%s184 + $0x90] sm:$0xff]
        %v238 = vld [vmem:[%s184 + $0x98] sm:$0xff]
        %v239 = vld [vmem:[%s184 + $0xa0] sm:$0xff]
        %v240 = vld [vmem:[%s184 + $0xa8] sm:$0xff]
        %v241 = vld [vmem:[%s184 + $0xb0] sm:$0xff]
        %v242 = vld [vmem:[%s184 + $0xb8] sm:$0xff]
        %v243 = vld [vmem:[%s184 + $0xc0] sm:$0xff]
        %v244 = vld [vmem:[%s184 + $0xc8] sm:$0xff]
        %v245 = vld [vmem:[%s184 + $0xd0] sm:$0xff]
        %v246 = vld [vmem:[%s184 + $0xd8] sm:$0xff]
        %v247 = vld [vmem:[%s184 + $0xe0] sm:$0xff]
        %v248 = vld [vmem:[%s184 + $0xe8] sm:$0xff]
        %v249 = vld [vmem:[%s184 + $0xf0] sm:$0xff]
        %v250 = vld [vmem:[%s184 + $0xf8] sm:$0xff]
        %v251 = vld [vmem:[#allocation5] sm:$0xff]
        %v252 = vld [vmem:[#allocation5 + $0x8] sm:$0xff]
        %v253 = vld [vmem:[#allocation5 + $0x10] sm:$0xff]
        %v254 = vld [vmem:[#allocation5 + $0x18] sm:$0xff]
        %v255 = vld [vmem:[#allocation5 + $0x20] sm:$0xff]
        %v256 = vld [vmem:[#allocation5 + $0x28] sm:$0xff]
        %v257 = vld [vmem:[#allocation5 + $0x30] sm:$0xff]
        %v258 = vld [vmem:[#allocation5 + $0x38] sm:$0xff]
        %v259 = vld [vmem:[#allocation5 + $0x40] sm:$0xff]
        %v260 = vld [vmem:[#allocation5 + $0x48] sm:$0xff]
        %v261 = vld [vmem:[#allocation5 + $0x50] sm:$0xff]
        %v262 = vld [vmem:[#allocation5 + $0x58] sm:$0xff]
        %v263 = vld [vmem:[#allocation5 + $0x60] sm:$0xff]
        %v264 = vld [vmem:[#allocation5 + $0x68] sm:$0xff]
        %v265 = vld [vmem:[#allocation5 + $0x70] sm:$0xff]
        %v266 = vld [vmem:[#allocation5 + $0x78] sm:$0xff]
        %v267 = vld [vmem:[#allocation5 + $0x80] sm:$0xff]
        %v268 = vld [vmem:[#allocation5 + $0x88] sm:$0xff]
        %v269 = vld [vmem:[#allocation5 + $0x90] sm:$0xff]
        %v270 = vld [vmem:[#allocation5 + $0x98] sm:$0xff]
        %v271 = vld [vmem:[#allocation5 + $0xa0] sm:$0xff]
        %v272 = vld [vmem:[#allocation5 + $0xa8] sm:$0xff]
        %v273 = vld [vmem:[#allocation5 + $0xb0] sm:$0xff]
        %v274 = vld [vmem:[#allocation5 + $0xb8] sm:$0xff]
        %v275 = vld [vmem:[#allocation5 + $0xc0] sm:$0xff]
        %v276 = vld [vmem:[#allocation5 + $0xc8] sm:$0xff]
        %v277 = vld [vmem:[#allocation5 + $0xd0] sm:$0xff]
        %v278 = vld [vmem:[#allocation5 + $0xd8] sm:$0xff]
        %v279 = vld [vmem:[#allocation5 + $0xe0] sm:$0xff]
        %v280 = vld [vmem:[#allocation5 + $0xe8] sm:$0xff]
        %v281 = vld [vmem:[#allocation5 + $0xf0] sm:$0xff]
        %v282 = vld [vmem:[#allocation5 + $0xf8] sm:$0xff]
        %283 = vmatprep.subr.mxu0 %v252
        %284 = vmatpush1.xpose.msra.mxu0 %v251
        %285 = vmatprep.subr.mxu0 %v254
        %286 = vmatpush1.xpose.msra.mxu0 %v253
        %287 = vmatprep.subr.mxu0 %v256
        %288 = vmatpush1.xpose.msra.mxu0 %v255
        %289 = vmatprep.subr.mxu0 %v258
        %290 = vmatpush1.xpose.msra.mxu0 %v257
        %291 = vmatprep.subr.mxu0 %v260
        %292 = vmatpush1.xpose.msra.mxu0 %v259
        %293 = vmatprep.subr.mxu0 %v262
        %294 = vmatpush1.xpose.msra.mxu0 %v261
        %295 = vmatprep.subr.mxu0 %v264
        %296 = vmatpush1.xpose.msra.mxu0 %v263
        %297 = vmatprep.subr.mxu0 %v266
        %298 = vmatpush1.xpose.msra.mxu0 %v265
        %299 = vmatprep.subr.mxu0 %v268
        %300 = vmatpush1.xpose.msra.mxu0 %v267
        %301 = vmatprep.subr.mxu0 %v270
        %302 = vmatpush1.xpose.msra.mxu0 %v269
        %303 = vmatprep.subr.mxu0 %v272
        %304 = vmatpush1.xpose.msra.mxu0 %v271
        %305 = vmatprep.subr.mxu0 %v274
        %306 = vmatpush1.xpose.msra.mxu0 %v273
        %307 = vmatprep.subr.mxu0 %v276
        %308 = vmatpush1.xpose.msra.mxu0 %v275
        %309 = vmatprep.subr.mxu0 %v278
        %310 = vmatpush1.xpose.msra.mxu0 %v277
        %311 = vmatprep.subr.mxu0 %v280
        %312 = vmatpush1.xpose.msra.mxu0 %v279
        %313 = vmatprep.subr.mxu0 %v282
        %314 = vmatpush1.xpose.msra.mxu0 %v281
        %315 = vmatprep.subr.mxu0 0.0
        %316 = vmatpush1.xpose.msra.mxu0 0.0
        %317 = vmatprep.subr.mxu0 0.0
        %318 = vmatpush1.xpose.msra.mxu0 0.0
        %319 = vmatprep.subr.mxu0 0.0
        %320 = vmatpush1.xpose.msra.mxu0 0.0
        %321 = vmatprep.subr.mxu0 0.0
        %322 = vmatpush1.xpose.msra.mxu0 0.0
        %323 = vmatprep.subr.mxu0 0.0
        %324 = vmatpush1.xpose.msra.mxu0 0.0
        %325 = vmatprep.subr.mxu0 0.0
        %326 = vmatpush1.xpose.msra.mxu0 0.0
        %327 = vmatprep.subr.mxu0 0.0
        %328 = vmatpush1.xpose.msra.mxu0 0.0
        %329 = vmatprep.subr.mxu0 0.0
        %330 = vmatpush1.xpose.msra.mxu0 0.0
        %331 = vmatprep.subr.mxu0 0.0
        %332 = vmatpush1.xpose.msra.mxu0 0.0
        %333 = vmatprep.subr.mxu0 0.0
        %334 = vmatpush1.xpose.msra.mxu0 0.0
        %335 = vmatprep.subr.mxu0 0.0
        %336 = vmatpush1.xpose.msra.mxu0 0.0
        %337 = vmatprep.subr.mxu0 0.0
        %338 = vmatpush1.xpose.msra.mxu0 0.0
        %339 = vmatprep.subr.mxu0 0.0
        %340 = vmatpush1.xpose.msra.mxu0 0.0
        %341 = vmatprep.subr.mxu0 0.0
        %342 = vmatpush1.xpose.msra.mxu0 0.0
        %343 = vmatprep.subr.mxu0 0.0
        %344 = vmatpush1.xpose.msra.mxu0 0.0
        %345 = vmatprep.subr.mxu0 0.0
        %346 = vmatpush1.xpose.msra.mxu0 0.0
        %347 = vmatprep.mubr.f32.mxu0 %v220
        %348 = vmatmul.mubr.f32.gmra.mrb[0].mxu0 %v219
        %v349 = vpop.f32.mrb[0].mxu0
        %v350 = vadd.f32 0.0, %v349
        %v351 = vpop.f32.mrb[0].mxu0
        %352 = vmatprep.mubr.f32.mxu0 %v222
        %353 = vmatmul.mubr.f32.gmra.mrb[0].mxu0 %v221
        %v354 = vpop.f32.mrb[0].mxu0
        %v355 = vadd.f32 0.0, %v354
        %v356 = vpop.f32.mrb[0].mxu0
        %357 = vmatprep.mubr.f32.mxu0 %v224
        %358 = vmatmul.mubr.f32.gmra.mrb[0].mxu0 %v223
        %v359 = vpop.f32.mrb[0].mxu0
        %v360 = vadd.f32 0.0, %v359
        %v361 = vpop.f32.mrb[0].mxu0
        %362 = vmatprep.mubr.f32.mxu0 %v226
        %363 = vmatmul.mubr.f32.gmra.mrb[0].mxu0 %v225
        %v364 = vpop.f32.mrb[0].mxu0
        %v365 = vadd.f32 0.0, %v364
        %v366 = vpop.f32.mrb[0].mxu0
        %367 = vmatprep.mubr.f32.mxu0 %v228
        %368 = vmatmul.mubr.f32.gmra.mrb[0].mxu0 %v227
        %v369 = vpop.f32.mrb[0].mxu0
        %v370 = vadd.f32 0.0, %v369
        %v371 = vpop.f32.mrb[0].mxu0
        %372 = vmatprep.mubr.f32.mxu0 %v230
        %373 = vmatmul.mubr.f32.gmra.mrb[0].mxu0 %v229
        %v374 = vpop.f32.mrb[0].mxu0
        %v375 = vadd.f32 0.0, %v374
        %v376 = vpop.f32.mrb[0].mxu0
        %377 = vmatprep.mubr.f32.mxu0 %v232
        %378 = vmatmul.mubr.f32.gmra.mrb[0].mxu0 %v231
        %v379 = vpop.f32.mrb[0].mxu0
        %v380 = vadd.f32 0.0, %v379
        %v381 = vpop.f32.mrb[0].mxu0
        %382 = vmatprep.mubr.f32.mxu0 %v234
        %383 = vmatmul.mubr.f32.gmra.mrb[0].mxu0 %v233
        %v384 = vpop.f32.mrb[0].mxu0
        %v385 = vadd.f32 0.0, %v384
        %v386 = vpop.f32.mrb[0].mxu0
        %387 = vmatprep.mubr.f32.mxu0 %v236
        %388 = vmatmul.mubr.f32.gmra.mrb[0].mxu0 %v235
        %v389 = vpop.f32.mrb[0].mxu0
        %v390 = vadd.f32 0.0, %v389
        %v391 = vpop.f32.mrb[0].mxu0
        %392 = vmatprep.mubr.f32.mxu0 %v238
        %393 = vmatmul.mubr.f32.gmra.mrb[0].mxu0 %v237
        %v394 = vpop.f32.mrb[0].mxu0
        %v395 = vadd.f32 0.0, %v394
        %v396 = vpop.f32.mrb[0].mxu0
        %397 = vmatprep.mubr.f32.mxu0 %v240
        %398 = vmatmul.mubr.f32.gmra.mrb[0].mxu0 %v239
        %v399 = vpop.f32.mrb[0].mxu0
        %v400 = vadd.f32 0.0, %v399
        %v401 = vpop.f32.mrb[0].mxu0
        %402 = vmatprep.mubr.f32.mxu0 %v242
        %403 = vmatmul.mubr.f32.gmra.mrb[0].mxu0 %v241
        %v404 = vpop.f32.mrb[0].mxu0
        %v405 = vadd.f32 0.0, %v404
        %v406 = vpop.f32.mrb[0].mxu0
        %407 = vmatprep.mubr.f32.mxu0 %v244
        %408 = vmatmul.mubr.f32.gmra.mrb[0].mxu0 %v243
        %v409 = vpop.f32.mrb[0].mxu0
        %v410 = vadd.f32 0.0, %v409
        %v411 = vpop.f32.mrb[0].mxu0
        %412 = vmatprep.mubr.f32.mxu0 %v246
        %413 = vmatmul.mubr.f32.gmra.mrb[0].mxu0 %v245
        %v414 = vpop.f32.mrb[0].mxu0
        %v415 = vadd.f32 0.0, %v414
        %v416 = vpop.f32.mrb[0].mxu0
        %417 = vmatprep.mubr.f32.mxu0 %v248
        %418 = vmatmul.mubr.f32.gmra.mrb[0].mxu0 %v247
        %v419 = vpop.f32.mrb[0].mxu0
        %v420 = vadd.f32 0.0, %v419
        %v421 = vpop.f32.mrb[0].mxu0
        %422 = vmatprep.mubr.f32.mxu0 %v250
        %423 = vmatmul.mubr.f32.gmra.mrb[0].mxu0 %v249
        %v424 = vpop.f32.mrb[0].mxu0
        %v425 = vadd.f32 0.0, %v424
        %v426 = vpop.f32.mrb[0].mxu0
        %427 = vdwg.mxu0
        %428 = vmatprep.subr.mxu0 %v252
        %429 = vmatpush1.msra.mxu0 %v251
        %430 = vmatprep.subr.mxu0 %v254
        %431 = vmatpush1.msra.mxu0 %v253
        %432 = vmatprep.subr.mxu0 %v256
        %433 = vmatpush1.msra.mxu0 %v255
        %434 = vmatprep.subr.mxu0 %v258
        %435 = vmatpush1.msra.mxu0 %v257
        %436 = vmatprep.subr.mxu0 %v260
        %437 = vmatpush1.msra.mxu0 %v259
        %438 = vmatprep.subr.mxu0 %v262
        %439 = vmatpush1.msra.mxu0 %v261
        %440 = vmatprep.subr.mxu0 %v264
        %441 = vmatpush1.msra.mxu0 %v263
        %442 = vmatprep.subr.mxu0 %v266
        %443 = vmatpush1.msra.mxu0 %v265
        %444 = vmatprep.subr.mxu0 %v268
        %445 = vmatpush1.msra.mxu0 %v267
        %446 = vmatprep.subr.mxu0 %v270
        %447 = vmatpush1.msra.mxu0 %v269
        %448 = vmatprep.subr.mxu0 %v272
        %449 = vmatpush1.msra.mxu0 %v271
        %450 = vmatprep.subr.mxu0 %v274
        %451 = vmatpush1.msra.mxu0 %v273
        %452 = vmatprep.subr.mxu0 %v276
        %453 = vmatpush1.msra.mxu0 %v275
        %454 = vmatprep.subr.mxu0 %v278
        %455 = vmatpush1.msra.mxu0 %v277
        %456 = vmatprep.subr.mxu0 %v280
        %457 = vmatpush1.msra.mxu0 %v279
        %458 = vmatprep.subr.mxu0 %v282
        %459 = vmatpush1.msra.mxu0 %v281
        %460 = vmatprep.subr.mxu0 0.0
        %461 = vmatpush1.msra.mxu0 0.0
        %462 = vmatprep.subr.mxu0 0.0
        %463 = vmatpush1.msra.mxu0 0.0
        %464 = vmatprep.subr.mxu0 0.0
        %465 = vmatpush1.msra.mxu0 0.0
        %466 = vmatprep.subr.mxu0 0.0
        %467 = vmatpush1.msra.mxu0 0.0
        %468 = vmatprep.subr.mxu0 0.0
        %469 = vmatpush1.msra.mxu0 0.0
        %470 = vmatprep.subr.mxu0 0.0
        %471 = vmatpush1.msra.mxu0 0.0
        %472 = vmatprep.subr.mxu0 0.0
        %473 = vmatpush1.msra.mxu0 0.0
        %474 = vmatprep.subr.mxu0 0.0
        %475 = vmatpush1.msra.mxu0 0.0
        %476 = vmatprep.subr.mxu0 0.0
        %477 = vmatpush1.msra.mxu0 0.0
        %478 = vmatprep.subr.mxu0 0.0
        %479 = vmatpush1.msra.mxu0 0.0
        %480 = vmatprep.subr.mxu0 0.0
        %481 = vmatpush1.msra.mxu0 0.0
        %482 = vmatprep.subr.mxu0 0.0
        %483 = vmatpush1.msra.mxu0 0.0
        %484 = vmatprep.subr.mxu0 0.0
        %485 = vmatpush1.msra.mxu0 0.0
        %486 = vmatprep.subr.mxu0 0.0
        %487 = vmatpush1.msra.mxu0 0.0
        %488 = vmatprep.subr.mxu0 0.0
        %489 = vmatpush1.msra.mxu0 0.0
        %490 = vmatprep.subr.mxu0 0.0
        %491 = vmatpush1.msra.mxu0 0.0
        %492 = vmatprep.mubr.f32.mxu0 0.0
        %493 = vmatmul.mubr.f32.gmra.mrb[0].mxu0 %v350
        %v494 = vpop.f32.mrb[0].mxu0
        %v495 = vadd.f32 0.0, %v494
        %v496 = vpop.f32.mrb[0].mxu0
        %v497 = vadd.f32 0.0, %v496
        %498 = vmatprep.mubr.f32.mxu0 0.0
        %499 = vmatmul.mubr.f32.gmra.mrb[0].mxu0 %v355
        %v500 = vpop.f32.mrb[0].mxu0
        %v501 = vadd.f32 0.0, %v500
        %v502 = vpop.f32.mrb[0].mxu0
        %v503 = vadd.f32 0.0, %v502
        %504 = vmatprep.mubr.f32.mxu0 0.0
        %505 = vmatmul.mubr.f32.gmra.mrb[0].mxu0 %v360
        %v506 = vpop.f32.mrb[0].mxu0
        %v507 = vadd.f32 0.0, %v506
        %v508 = vpop.f32.mrb[0].mxu0
        %v509 = vadd.f32 0.0, %v508
        %510 = vmatprep.mubr.f32.mxu0 0.0
        %511 = vmatmul.mubr.f32.gmra.mrb[0].mxu0 %v365
        %v512 = vpop.f32.mrb[0].mxu0
        %v513 = vadd.f32 0.0, %v512
        %v514 = vpop.f32.mrb[0].mxu0
        %v515 = vadd.f32 0.0, %v514
        %516 = vmatprep.mubr.f32.mxu0 0.0
        %517 = vmatmul.mubr.f32.gmra.mrb[0].mxu0 %v370
        %v518 = vpop.f32.mrb[0].mxu0
        %v519 = vadd.f32 0.0, %v518
        %v520 = vpop.f32.mrb[0].mxu0
        %v521 = vadd.f32 0.0, %v520
        %522 = vmatprep.mubr.f32.mxu0 0.0
        %523 = vmatmul.mubr.f32.gmra.mrb[0].mxu0 %v375
        %v524 = vpop.f32.mrb[0].mxu0
        %v525 = vadd.f32 0.0, %v524
        %v526 = vpop.f32.mrb[0].mxu0
        %v527 = vadd.f32 0.0, %v526
        %528 = vmatprep.mubr.f32.mxu0 0.0
        %529 = vmatmul.mubr.f32.gmra.mrb[0].mxu0 %v380
        %v530 = vpop.f32.mrb[0].mxu0
        %v531 = vadd.f32 0.0, %v530
        %v532 = vpop.f32.mrb[0].mxu0
        %v533 = vadd.f32 0.0, %v532
        %534 = vmatprep.mubr.f32.mxu0 0.0
        %535 = vmatmul.mubr.f32.gmra.mrb[0].mxu0 %v385
        %v536 = vpop.f32.mrb[0].mxu0
        %v537 = vadd.f32 0.0, %v536
        %v538 = vpop.f32.mrb[0].mxu0
        %v539 = vadd.f32 0.0, %v538
        %540 = vmatprep.mubr.f32.mxu0 0.0
        %541 = vmatmul.mubr.f32.gmra.mrb[0].mxu0 %v390
        %v542 = vpop.f32.mrb[0].mxu0
        %v543 = vadd.f32 0.0, %v542
        %v544 = vpop.f32.mrb[0].mxu0
        %v545 = vadd.f32 0.0, %v544
        %546 = vmatprep.mubr.f32.mxu0 0.0
        %547 = vmatmul.mubr.f32.gmra.mrb[0].mxu0 %v395
        %v548 = vpop.f32.mrb[0].mxu0
        %v549 = vadd.f32 0.0, %v548
        %v550 = vpop.f32.mrb[0].mxu0
        %v551 = vadd.f32 0.0, %v550
        %552 = vmatprep.mubr.f32.mxu0 0.0
        %553 = vmatmul.mubr.f32.gmra.mrb[0].mxu0 %v400
        %v554 = vpop.f32.mrb[0].mxu0
        %v555 = vadd.f32 0.0, %v554
        %v556 = vpop.f32.mrb[0].mxu0
        %v557 = vadd.f32 0.0, %v556
        %558 = vmatprep.mubr.f32.mxu0 0.0
        %559 = vmatmul.mubr.f32.gmra.mrb[0].mxu0 %v405
        %v560 = vpop.f32.mrb[0].mxu0
        %v561 = vadd.f32 0.0, %v560
        %v562 = vpop.f32.mrb[0].mxu0
        %v563 = vadd.f32 0.0, %v562
        %564 = vmatprep.mubr.f32.mxu0 0.0
        %565 = vmatmul.mubr.f32.gmra.mrb[0].mxu0 %v410
        %v566 = vpop.f32.mrb[0].mxu0
        %v567 = vadd.f32 0.0, %v566
        %v568 = vpop.f32.mrb[0].mxu0
        %v569 = vadd.f32 0.0, %v568
        %570 = vmatprep.mubr.f32.mxu0 0.0
        %571 = vmatmul.mubr.f32.gmra.mrb[0].mxu0 %v415
        %v572 = vpop.f32.mrb[0].mxu0
        %v573 = vadd.f32 0.0, %v572
        %v574 = vpop.f32.mrb[0].mxu0
        %v575 = vadd.f32 0.0, %v574
        %576 = vmatprep.mubr.f32.mxu0 0.0
        %577 = vmatmul.mubr.f32.gmra.mrb[0].mxu0 %v420
        %v578 = vpop.f32.mrb[0].mxu0
        %v579 = vadd.f32 0.0, %v578
        %v580 = vpop.f32.mrb[0].mxu0
        %v581 = vadd.f32 0.0, %v580
        %582 = vmatprep.mubr.f32.mxu0 0.0
        %583 = vmatmul.mubr.f32.gmra.mrb[0].mxu0 %v425
        %v584 = vpop.f32.mrb[0].mxu0
        %v585 = vadd.f32 0.0, %v584
        %v586 = vpop.f32.mrb[0].mxu0
        %v587 = vadd.f32 0.0, %v586
        %588 = vdwg.mxu0
        %589 = vst [vmem:[%s208] sm:$0xff] %v350
        %590 = vst [vmem:[%s208 + $0x8] sm:$0xff] %v355
        %591 = vst [vmem:[%s208 + $0x10] sm:$0xff] %v360
        %592 = vst [vmem:[%s208 + $0x18] sm:$0xff] %v365
        %593 = vst [vmem:[%s208 + $0x20] sm:$0xff] %v370
        %594 = vst [vmem:[%s208 + $0x28] sm:$0xff] %v375
        %595 = vst [vmem:[%s208 + $0x30] sm:$0xff] %v380
        %596 = vst [vmem:[%s208 + $0x38] sm:$0xff] %v385
        %597 = vst [vmem:[%s208 + $0x40] sm:$0xff] %v390
        %598 = vst [vmem:[%s208 + $0x48] sm:$0xff] %v395
        %599 = vst [vmem:[%s208 + $0x50] sm:$0xff] %v400
        %600 = vst [vmem:[%s208 + $0x58] sm:$0xff] %v405
        %601 = vst [vmem:[%s208 + $0x60] sm:$0xff] %v410
        %602 = vst [vmem:[%s208 + $0x68] sm:$0xff] %v415
        %603 = vst [vmem:[%s208 + $0x70] sm:$0xff] %v420
        %604 = vst [vmem:[%s208 + $0x78] sm:$0xff] %v425
        %605 = vst [vmem:[%s215] sm:$0xff] %v495
        %606 = vst [vmem:[%s215 + $0x8] sm:$0xff] %v497
        %607 = vst [vmem:[%s215 + $0x10] sm:$0xff] %v501
        %608 = vst [vmem:[%s215 + $0x18] sm:$0xff] %v503
        %609 = vst [vmem:[%s215 + $0x20] sm:$0xff] %v507
        %610 = vst [vmem:[%s215 + $0x28] sm:$0xff] %v509
        %611 = vst [vmem:[%s215 + $0x30] sm:$0xff] %v513
        %612 = vst [vmem:[%s215 + $0x38] sm:$0xff] %v515
        %613 = vst [vmem:[%s215 + $0x40] sm:$0xff] %v519
        %614 = vst [vmem:[%s215 + $0x48] sm:$0xff] %v521
        %615 = vst [vmem:[%s215 + $0x50] sm:$0xff] %v525
        %616 = vst [vmem:[%s215 + $0x58] sm:$0xff] %v527
        %617 = vst [vmem:[%s215 + $0x60] sm:$0xff] %v531
        %618 = vst [vmem:[%s215 + $0x68] sm:$0xff] %v533
        %619 = vst [vmem:[%s215 + $0x70] sm:$0xff] %v537
        %620 = vst [vmem:[%s215 + $0x78] sm:$0xff] %v539
        %621 = vst [vmem:[%s215 + $0x80] sm:$0xff] %v543
        %622 = vst [vmem:[%s215 + $0x88] sm:$0xff] %v545
        %623 = vst [vmem:[%s215 + $0x90] sm:$0xff] %v549
        %624 = vst [vmem:[%s215 + $0x98] sm:$0xff] %v551
        %625 = vst [vmem:[%s215 + $0xa0] sm:$0xff] %v555
        %626 = vst [vmem:[%s215 + $0xa8] sm:$0xff] %v557
        %627 = vst [vmem:[%s215 + $0xb0] sm:$0xff] %v561
        %628 = vst [vmem:[%s215 + $0xb8] sm:$0xff] %v563
        %629 = vst [vmem:[%s215 + $0xc0] sm:$0xff] %v567
        %630 = vst [vmem:[%s215 + $0xc8] sm:$0xff] %v569
        %631 = vst [vmem:[%s215 + $0xd0] sm:$0xff] %v573
        %632 = vst [vmem:[%s215 + $0xd8] sm:$0xff] %v575
        %633 = vst [vmem:[%s215 + $0xe0] sm:$0xff] %v579
        %634 = vst [vmem:[%s215 + $0xe8] sm:$0xff] %v581
        %635 = vst [vmem:[%s215 + $0xf0] sm:$0xff] %v585
        %636 = vst [vmem:[%s215 + $0xf8] sm:$0xff] %v587
        %s637 = sand.u32 %s80, 1
        %s638 = scalar_lea.sflag [#allocation4], %s637
        %s639 = sand.u32 %s80, 1
        %s640 = smul.addr %s639, 128
        %s641 = scalar_lea.vmem [#allocation7], %s640
        %s642 = sand.u32 %s106, 1
        %s643 = scalar_lea.sflag [#allocation9], %s642
        %s644 = sand.u32 %s106, 1
        %s645 = smul.addr %s644, 256
        %s646 = scalar_lea.vmem [#allocation8], %s645
        // Predicated region
        $region37: #{tpu_custom_call.1} parent=27 // pred_check
          %p647 = pneg %p90
        $region38: #{tpu_custom_call.1} parent=27 // pred_check_branch
          %649 = sbr.rel (%p647) target = $region40
        $region39: #{tpu_custom_call.1} parent=27 // pred_region
          %s650 = smul.u32 16, %s25
          %s652 = ssub.s32 2048, 2048
          %653 = vsyncadd %s638, %s652
          %s654 = smul.addr %s650, 128
          %s655 = scalar_lea.hbm %s2, %s654
          %s656 = sshll.u32 %s641, 4
          %s657 = int_to_ptr.vmem [resolvable:$true] %s656
          %662 = dma.vmem_to_hbm [thread:$0]  %s657, 2048, %s655, %s638, 128, 128, 8
        $region40: #{tpu_custom_call.1} parent=27 // pred_fallthru
          _
        // Predicated region
        $region41: #{tpu_custom_call.1} parent=27 // pred_check
          %p663 = pneg %p116
        $region42: #{tpu_custom_call.1} parent=27 // pred_check_branch
          %665 = sbr.rel (%p663) target = $region44
        $region43: #{tpu_custom_call.1} parent=27 // pred_region
          %s666 = smul.u32 16, %s25
          %s668 = ssub.s32 4096, 4096
          %669 = vsyncadd %s643, %s668
          %s670 = smul.addr %s666, 2
          %s671 = smul.addr %s670, 128
          %s672 = scalar_lea.hbm %s3, %s671
          %s673 = sshll.u32 %s646, 4
          %s674 = int_to_ptr.vmem [resolvable:$true] %s673
          %679 = dma.vmem_to_hbm [thread:$0]  %s674, 4096, %s672, %s643, 256, 256, 16
        $region44: #{tpu_custom_call.1} parent=27 // pred_fallthru
          _
      $region28: #{tpu_custom_call.1} parent=5 // pred_fallthru
        _
      %p680 = scmp.le.s32.totalorder 2, %s20
      // Predicated region
      $region45: #{tpu_custom_call.1} parent=5 // pred_check
        %p681 = pneg %p680
      $region46: #{tpu_custom_call.1} parent=5 // pred_check_branch
        %683 = sbr.rel (%p681) target = $region48
      $region47: #{tpu_custom_call.1} parent=5 // pred_region
        %s684 = ssub.s32 %s20, 2
        // Predicated region
        $region49: #{tpu_custom_call.1} parent=47 // pred_check
          %p685 = pneg %p96
        $region50: #{tpu_custom_call.1} parent=47 // pred_check_branch
          %687 = sbr.rel (%p685) target = $region52
        $region51: #{tpu_custom_call.1} parent=47 // pred_region
          %s688 = sand.u32 %s81, 1
          %s689 = scalar_lea.sflag [#allocation4], %s688
          %s690 = sand.u32 %s81, 1
          %s691 = smul.addr %s690, 128
          %s692 = scalar_lea.vmem [#allocation7], %s691
          %693 = dma.done %s689, 2048
        $region52: #{tpu_custom_call.1} parent=47 // pred_fallthru
          _
        // Predicated region
        $region53: #{tpu_custom_call.1} parent=47 // pred_check
          %p694 = pneg %p122
        $region54: #{tpu_custom_call.1} parent=47 // pred_check_branch
          %696 = sbr.rel (%p694) target = $region56
        $region55: #{tpu_custom_call.1} parent=47 // pred_region
          %s697 = sand.u32 %s107, 1
          %s698 = scalar_lea.sflag [#allocation9], %s697
          %s699 = sand.u32 %s107, 1
          %s700 = smul.addr %s699, 256
          %s701 = scalar_lea.vmem [#allocation8], %s700
          %702 = dma.done %s698, 4096
        $region56: #{tpu_custom_call.1} parent=47 // pred_fallthru
          _
      $region48: #{tpu_custom_call.1} parent=5 // pred_fallthru
        _
    $region6: #{tpu_custom_call.1} parent=1 // loop_footer
      %s24 = sadd.s32 1, %s20
    $region7: #{tpu_custom_call.1} parent=1 // loop_footer_branch
      %19 = sbr.rel target = $region3
    $region8: #{tpu_custom_call.1} parent=1 // loop_exit
      _
    %703 = vsyncpa [#allocation3], 1
    %s704 = scalar_lea.sflag [#allocation3], 1
    %705 = vsyncpa %s704, 1
    %706 = vsyncpa [#allocation6], 1
    %707 = vsyncpa [#allocation4], 1
    %s708 = scalar_lea.sflag [#allocation4], 1
    %709 = vsyncpa %s708, 1
    %710 = vsyncpa [#allocation9], 1
    %s711 = scalar_lea.sflag [#allocation9], 1
    %712 = vsyncpa %s711, 1

</llo_original>
